<compile_context>
chip_gen: v6e
topology: v6e:2x2x1
jax: 0.10.0
libtpu: 0.0.40
codegen_flags: <defaults>
</compile_context>

<pallas_src>
import functools

import jax
import jax.numpy as jnp
from jax import lax
from jax.experimental import pallas as pl
from jax.experimental.pallas import tpu as pltpu


def _ahil_kernel(x_ref, w1_ref, b1_ref, wa_ref, b2_ref, o_ref, *,
                 block_n, lin, hw, w_img):
    # x_ref:  (1, Cin, block_n*lin + tail) bf16 flat-shift layout; per image `lin` lanes =
    #         [2 zero rows | H image rows | >=2 zero rows], each row `w_img` wide.
    # w1_ref: (Cout, 9*Cin) bf16 conv weight (BN1 scale folded), tap-major, Cin innermost.
    # b1_ref: (Cout, 1)     f32 folded BN1 bias.
    # wa_ref: (Cout, Cout)  bf16 1x1 attention weight (BN2 scale folded).
    # b2_ref: (Cout, 1)     f32 folded BN2 bias.
    # o_ref:  (block_n, Cout, hw) lane-dense output block.
    ncols = block_n * lin
    x = x_ref[0]                                            # (Cin, Next) bf16

    # Column index (within an image row) of every stored element; `lin` is a multiple of
    # w_img, so one global iota is consistent for every image in the block.
    col = lax.broadcasted_iota(jnp.int32, (1, x.shape[-1]), 1) % w_img
    # SAME column padding via edge masks: kx=0 (left) taps must not pick up the previous
    # row's last column, kx=2 (right) taps not the next row's first column.
    x_l = x * (col != (w_img - 1)).astype(x.dtype)
    x_r = x * (col != 0).astype(x.dtype)
    srcs = (x_l, x, x_r)

    # Build the (9*Cin, ncols) patch matrix from 9 static lane-shifted slices (VMEM-local),
    # then run ONE wide MXU matmul for all images in the block.
    parts = []
    for ky in range(3):
        for kx in range(3):
            s = (ky + 1) * w_img + (kx - 1)                 # >= w_img - 1 >= 0
            parts.append(srcs[kx][:, s:s + ncols])
    patches = jnp.concatenate(parts, axis=0)                # (9*Cin, ncols) bf16

    feat = jnp.dot(w1_ref[...], patches,
                   preferred_element_type=jnp.float32)      # (Cout, ncols) f32
    feat = feat + b1_ref[...]                               # BN1 bias (scale folded in w1)

    # Global average pool per image: columns [b*lin, b*lin + hw) are image b's valid
    # conv outputs (the rest of each lin-segment is junk and never read again).
    pooled = jnp.concatenate(
        [jnp.sum(feat[:, b * lin:b * lin + hw], axis=1, keepdims=True)
         for b in range(block_n)], axis=1) * (1.0 / hw)     # (Cout, block_n) f32

    # Batched attention path: one small matmul + one sigmoid for the whole block.
    z = jnp.dot(wa_ref[...], pooled.astype(jnp.bfloat16),
                preferred_element_type=jnp.float32)         # (Cout, block_n)
    atten = jax.nn.sigmoid(z + b2_ref[...])                 # BN2 bias + sigmoid

    for b in range(block_n):                                # static, small unrolled loop
        o_ref[b] = (feat[:, b * lin:b * lin + hw]
                    * atten[:, b:b + 1]).astype(o_ref.dtype)


def _tpu_vmem_capacity_bytes():
    try:
        return int(pltpu.get_tpu_info().vmem_capacity_bytes)
    except Exception:
        return 128 << 20                                    # v5e/v6e default


def ahil_block(x_nchw, w1_oihw, s1, b1, wa_oi, s2, b2, *,
               block_n=None, out_dtype=jnp.bfloat16):
    """AHILBlock forward (inference-mode BN).

    x_nchw:  (N, Cin, H, W) float32
    w1_oihw: (Cout, Cin, 3, 3) conv weight
    s1, b1:  (Cout,) folded BN1 scale / bias
    wa_oi:   (Cout, Cout) 1x1 attention conv weight [out, in]
    s2, b2:  (Cout,) folded BN2 scale / bias
    returns  (N, Cout, H, W) in out_dtype (bf16 by default; matmul inputs are bf16 anyway)
    """
    N, Cin, H, W = x_nchw.shape
    Cout = w1_oihw.shape[0]
    HW = H * W

    # ---- flat-shift geometry ----------------------------------------------------------
    # Per-image segment: 2 leading zero rows (top SAME pad + read guard), H image rows,
    # >=2 trailing zero rows (bottom SAME pad + read guard); bump the row count so the
    # segment length is a multiple of 128 when cheap (keeps per-image slices lane-aligned).
    rows = H + 4
    for extra in range(0, 2 * (H + 4)):
        if ((rows + extra) * W) % 128 == 0:
            rows += extra
            break
    Lin = rows * W
    TAIL = pl.cdiv(3 * W + 2, 128) * 128    # guard lanes: the last image's junk columns
                                            # never read past the block.

    vmem_cap = _tpu_vmem_capacity_bytes()

    # ---- per-step batch block from a VMEM budget ----------------------------------------
    if block_n is None:
        per_image = ((3 * Cin * 2 + 9 * Cin * 2 + Cout * 4) * Lin   # x/x_l/x_r, patches, feat
                     + 3 * Cout * HW * 2)                           # output (+ double buffer)
        budget = min(vmem_cap // 4, 24 << 20)
        block_n = max(1, min(N, max(1, budget // per_image), 32))   # 32: unroll-sanity cap
        # v7x-like parts (64 MiB VMEM, 2 TensorCores): prefer an even, >=4-step parallel
        # grid so both cores get balanced work; single-core v5e/v6e keep the bigger block.
        if vmem_cap <= (64 << 20) and N >= 8:
            while block_n > 1 and (pl.cdiv(N, block_n) < 4
                                   or pl.cdiv(N, block_n) % 2 != 0):
                block_n -= 1
    n_steps = pl.cdiv(N, block_n)
    n_pad = n_steps * block_n      # padded batch rows produce finite garbage that is
                                   # sliced off below -- never read out_pad[N:].

    # ---- prep: one bf16 pad + transpose pass (no HBM im2col) ----------------------------
    xp = jnp.pad(x_nchw.astype(jnp.bfloat16),
                 ((0, n_pad - N), (0, 0), (2, rows - H - 2), (0, 0)))
    xp = xp.reshape(n_pad, Cin, Lin)
    xp = (xp.reshape(n_steps, block_n, Cin, Lin)
            .transpose(0, 2, 1, 3)
            .reshape(n_steps, Cin, block_n * Lin))
    x_prep = jnp.pad(xp, ((0, 0), (0, 0), (0, TAIL)))
    Next = block_n * Lin + TAIL

    # ---- fold BN scales into the weights ------------------------------------------------
    w1f = ((w1_oihw * s1[:, None, None, None])
           .transpose(0, 2, 3, 1).reshape(Cout, 9 * Cin).astype(jnp.bfloat16))
    waf = (wa_oi * s2[:, None]).astype(jnp.bfloat16)
    b1c = b1.reshape(Cout, 1).astype(jnp.float32)
    b2c = b2.reshape(Cout, 1).astype(jnp.float32)

    kernel = functools.partial(_ahil_kernel, block_n=block_n, lin=Lin, hw=HW, w_img=W)

    # Raise the scoped VMEM limit only when needed, and never above 3/4 of physical VMEM
    # (v7x has only 64 MiB).
    io_bytes = 2 * Cin * Next * 2 + 2 * block_n * Cout * HW * 2
    tmp_bytes = (3 * Cin * 2 + 9 * Cin * 2) * Next + Cout * 4 * block_n * Lin
    est = io_bytes + tmp_bytes + (2 << 20)
    cp_kwargs = dict(dimension_semantics=("parallel",))
    if est > (16 << 20):
        cp_kwargs["vmem_limit_bytes"] = int(min(est + (4 << 20), (vmem_cap * 3) // 4))

    out_pad = pl.pallas_call(
        kernel,
        out_shape=jax.ShapeDtypeStruct((n_pad, Cout, HW), out_dtype),
        grid_spec=pltpu.PrefetchScalarGridSpec(
            num_scalar_prefetch=0,
            grid=(n_steps,),
            in_specs=[
                pl.BlockSpec((1, Cin, Next), lambda n: (n, 0, 0)),
                pl.BlockSpec((Cout, 9 * Cin), lambda n: (0, 0)),
                pl.BlockSpec((Cout, 1), lambda n: (0, 0)),
                pl.BlockSpec((Cout, Cout), lambda n: (0, 0)),
                pl.BlockSpec((Cout, 1), lambda n: (0, 0)),
            ],
            out_specs=pl.BlockSpec((block_n, Cout, HW), lambda n: (n, 0, 0)),
        ),
        compiler_params=pltpu.CompilerParams(**cp_kwargs),
    )(x_prep, w1f, b1c, waf, b2c)

    # Metadata-only reshape; drop padded batch rows (their contents are garbage).
    return out_pad[:N].reshape(N, Cout, H, W)


def _reference(x_nchw, w1_oihw, s1, b1, wa_oi, s2, b2):
    """Pure-JAX f32 reference (matches the PyTorch eval() forward)."""
    feat = lax.conv_general_dilated(
        x_nchw, w1_oihw, window_strides=(1, 1), padding="SAME",
        dimension_numbers=("NCHW", "OIHW", "NCHW"))
    feat = feat * s1[None, :, None, None] + b1[None, :, None, None]
    pooled = jnp.mean(feat, axis=(2, 3), keepdims=True)               # (N, Cout, 1, 1)
    z = jnp.einsum("oi,nixy->noxy", wa_oi, pooled)
    atten = jax.nn.sigmoid(z * s2[None, :, None, None] + b2[None, :, None, None])
    return feat * atten


def _fold_bn(gamma, beta, mean, var, eps=1e-5):
    scale = gamma / jnp.sqrt(var + eps)
    bias = beta - mean * scale
    return scale, bias


if __name__ == "__main__":
    key = jax.random.PRNGKey(0)
    N, Cin, Cout, H, W = 2, 4, 8, 16, 16

    ks = jax.random.split(key, 9)
    # 3x3 conv weight, Kaiming normal with a=1 -> std = sqrt(1 / fan_in)
    fan_in1 = Cin * 3 * 3
    w1_pt = jax.random.normal(ks[0], (Cout, Cin, 3, 3), jnp.float32) * (1.0 / fan_in1) ** 0.5
    wa_pt = jax.random.normal(ks[1], (Cout, Cout, 1, 1), jnp.float32) * (1.0 / Cout) ** 0.5

    # Deterministic (non-trivial) BN parameters, inference-mode fold.
    g1 = 1.0 + 0.1 * jax.random.normal(ks[2], (Cout,), jnp.float32)
    bt1 = 0.1 * jax.random.normal(ks[3], (Cout,), jnp.float32)
    m1 = 0.05 * jax.random.normal(ks[4], (Cout,), jnp.float32)
    v1 = 1.0 + 0.1 * jax.random.uniform(ks[5], (Cout,), jnp.float32)
    g2 = 1.0 + 0.1 * jax.random.normal(ks[6], (Cout,), jnp.float32)
    bt2 = 0.1 * jax.random.normal(ks[7], (Cout,), jnp.float32)
    m2 = jnp.zeros((Cout,), jnp.float32)
    v2 = jnp.ones((Cout,), jnp.float32)

    s1, b1 = _fold_bn(g1, bt1, m1, v1)
    s2, b2 = _fold_bn(g2, bt2, m2, v2)

    x_nchw = jax.random.normal(ks[8], (N, Cin, H, W), jnp.float32)
    wa_oi = wa_pt[:, :, 0, 0]                               # (Cout_out, Cout_in)

    out = ahil_block(x_nchw, w1_pt, s1, b1, wa_oi, s2, b2)
    out = jax.block_until_ready(out)

    ref = _reference(x_nchw, w1_pt, s1, b1, wa_oi, s2, b2)
    ref = jax.block_until_ready(ref)

    assert out.shape == (N, Cout, H, W)
    out_f32 = out.astype(jnp.float32)
    assert bool(jnp.all(jnp.isfinite(out_f32)))
    max_err = float(jnp.max(jnp.abs(out_f32 - ref)))
    # bf16 matmul inputs + bf16 output storage, f32 accumulation: looser than pure f32.
    assert jnp.allclose(out_f32, ref, atol=6e-2, rtol=6e-2), max_err

    print("KERNEL_OK")
</pallas_src>

<mosaic_0001>
module attributes {stable_mosaic.version = 11 : i64} {
  func.func @_ahil_kernel(%arg0: i32, %arg1: memref<1x4x896xbf16, #tpu.memory_space<vmem>>, %arg2: memref<8x36xbf16, #tpu.memory_space<vmem>>, %arg3: memref<8x1xf32, #tpu.memory_space<vmem>>, %arg4: memref<8x8xbf16, #tpu.memory_space<vmem>>, %arg5: memref<8x1xf32, #tpu.memory_space<vmem>>, %arg6: memref<2x8x256xbf16, #tpu.memory_space<vmem>>) attributes {dimension_semantics = [#tpu.dimension_semantics<parallel>], iteration_bounds = array<i64: 1>, scalar_prefetch = 0 : i64, scratch_operands = 0 : i64, tpu.core_type = #tpu.core_type<tc>, window_params = [{transform_indices = @transform_0, window_bounds = array<i64: 1, 4, 896>}, {pipeline_mode = #tpu.pipeline_mode<synchronous>, transform_indices = @transform_1, window_bounds = array<i64: 8, 36>}, {pipeline_mode = #tpu.pipeline_mode<synchronous>, transform_indices = @transform_2, window_bounds = array<i64: 8, 1>}, {pipeline_mode = #tpu.pipeline_mode<synchronous>, transform_indices = @transform_3, window_bounds = array<i64: 8, 8>}, {pipeline_mode = #tpu.pipeline_mode<synchronous>, transform_indices = @transform_4, window_bounds = array<i64: 8, 1>}, {transform_indices = @transform_5, window_bounds = array<i64: 2, 8, 256>}]} {
    %c0 = arith.constant 0 : index
    %c0_0 = arith.constant 0 : index
    %c0_1 = arith.constant 0 : index
    %0 = vector.load %arg1[%c0, %c0_0, %c0_1] : memref<1x4x896xbf16, #tpu.memory_space<vmem>>, vector<1x4x896xbf16>
    %1 = vector.shape_cast %0 : vector<1x4x896xbf16> to vector<4x896xbf16>
    %2 = tpu.iota {dimensions = array<i32: 1>} : vector<1x896xi32>
    %c16_i32 = arith.constant 16 : i32
    %c0_i32 = arith.constant 0 : i32
    %3 = arith.cmpi eq, %c16_i32, %c0_i32 : i32
    %c1_i32 = arith.constant 1 : i32
    %4 = arith.select %3, %c1_i32, %c16_i32 : i32
    %5 = vector.broadcast %4 : i32 to vector<1x896xi32>
    %6 = arith.remsi %2, %5 : vector<1x896xi32>
    %c0_i32_2 = arith.constant 0 : i32
    %7 = vector.broadcast %c0_i32_2 : i32 to vector<1x896xi32>
    %8 = arith.cmpi ne, %6, %7 : vector<1x896xi32>
    %c0_i32_3 = arith.constant 0 : i32
    %9 = vector.broadcast %c0_i32_3 : i32 to vector<1x896xi32>
    %10 = arith.cmpi slt, %6, %9 : vector<1x896xi32>
    %c0_i32_4 = arith.constant 0 : i32
    %11 = arith.cmpi slt, %4, %c0_i32_4 : i32
    %12 = vector.broadcast %11 : i1 to vector<1x896xi1>
    %13 = vector.broadcast %12 : vector<1x896xi1> to vector<1x896xi1>
    %14 = arith.xori %10, %13 : vector<1x896xi1>
    %15 = arith.andi %14, %8 : vector<1x896xi1>
    %16 = vector.broadcast %4 : i32 to vector<1x896xi32>
    %17 = arith.addi %6, %16 : vector<1x896xi32>
    %18 = arith.select %15, %17, %6 : vector<1x896xi1>, vector<1x896xi32>
    %c15_i32 = arith.constant 15 : i32
    %19 = vector.broadcast %c15_i32 : i32 to vector<1x896xi32>
    %20 = arith.cmpi ne, %18, %19 : vector<1x896xi32>
    %21 = arith.extui %20 : vector<1x896xi1> to vector<1x896xi32>
    %22 = arith.sitofp %21 : vector<1x896xi32> to vector<1x896xf32>
    %23 = arith.truncf %22 : vector<1x896xf32> to vector<1x896xbf16>
    %24 = vector.broadcast %23 : vector<1x896xbf16> to vector<4x896xbf16>
    %25 = arith.mulf %1, %24 : vector<4x896xbf16>
    %c0_i32_5 = arith.constant 0 : i32
    %26 = vector.broadcast %c0_i32_5 : i32 to vector<1x896xi32>
    %27 = arith.cmpi ne, %18, %26 : vector<1x896xi32>
    %28 = arith.extui %27 : vector<1x896xi1> to vector<1x896xi32>
    %29 = arith.sitofp %28 : vector<1x896xi32> to vector<1x896xf32>
    %30 = arith.truncf %29 : vector<1x896xf32> to vector<1x896xbf16>
    %31 = vector.broadcast %30 : vector<1x896xbf16> to vector<4x896xbf16>
    %32 = arith.mulf %1, %31 : vector<4x896xbf16>
    %33 = vector.extract_strided_slice %25 {offsets = [0, 15], sizes = [4, 768], strides = [1, 1]} : vector<4x896xbf16> to vector<4x768xbf16>
    %34 = vector.extract_strided_slice %1 {offsets = [0, 16], sizes = [4, 768], strides = [1, 1]} : vector<4x896xbf16> to vector<4x768xbf16>
    %35 = vector.extract_strided_slice %32 {offsets = [0, 17], sizes = [4, 768], strides = [1, 1]} : vector<4x896xbf16> to vector<4x768xbf16>
    %36 = vector.extract_strided_slice %25 {offsets = [0, 31], sizes = [4, 768], strides = [1, 1]} : vector<4x896xbf16> to vector<4x768xbf16>
    %37 = vector.extract_strided_slice %1 {offsets = [0, 32], sizes = [4, 768], strides = [1, 1]} : vector<4x896xbf16> to vector<4x768xbf16>
    %38 = vector.extract_strided_slice %32 {offsets = [0, 33], sizes = [4, 768], strides = [1, 1]} : vector<4x896xbf16> to vector<4x768xbf16>
    %39 = vector.extract_strided_slice %25 {offsets = [0, 47], sizes = [4, 768], strides = [1, 1]} : vector<4x896xbf16> to vector<4x768xbf16>
    %40 = vector.extract_strided_slice %1 {offsets = [0, 48], sizes = [4, 768], strides = [1, 1]} : vector<4x896xbf16> to vector<4x768xbf16>
    %41 = vector.extract_strided_slice %32 {offsets = [0, 49], sizes = [4, 768], strides = [1, 1]} : vector<4x896xbf16> to vector<4x768xbf16>
    %42 = tpu.concatenate %33, %34, %35, %36, %37, %38, %39, %40, %41 in 0 : vector<4x768xbf16>, vector<4x768xbf16>, vector<4x768xbf16>, vector<4x768xbf16>, vector<4x768xbf16>, vector<4x768xbf16>, vector<4x768xbf16>, vector<4x768xbf16>, vector<4x768xbf16> -> vector<36x768xbf16>
    %c0_6 = arith.constant 0 : index
    %c0_7 = arith.constant 0 : index
    %43 = vector.load %arg2[%c0_6, %c0_7] : memref<8x36xbf16, #tpu.memory_space<vmem>>, vector<8x36xbf16>
    %cst = arith.constant dense<0.000000e+00> : vector<8x768xf32>
    %44 = tpu.matmul %43, %42, %cst {dimension_numbers = #tpu.dot_dimension_numbers<[1], [0], [0], [1], [0, 0, 1, 1], [], []>} : vector<8x36xbf16>, vector<36x768xbf16>, vector<8x768xf32> -> vector<8x768xf32>
    %c0_8 = arith.constant 0 : index
    %c0_9 = arith.constant 0 : index
    %45 = vector.load %arg3[%c0_8, %c0_9] : memref<8x1xf32, #tpu.memory_space<vmem>>, vector<8x1xf32>
    %46 = vector.broadcast %45 : vector<8x1xf32> to vector<8x768xf32>
    %47 = arith.addf %44, %46 : vector<8x768xf32>
    %48 = vector.extract_strided_slice %47 {offsets = [0, 0], sizes = [8, 256], strides = [1, 1]} : vector<8x768xf32> to vector<8x256xf32>
    %cst_10 = arith.constant dense<0.000000e+00> : vector<8xf32>
    %49 = vector.multi_reduction <add>, %48, %cst_10 [1] : vector<8x256xf32> to vector<8xf32>
    %50 = vector.shape_cast %49 : vector<8xf32> to vector<8x1xf32>
    %51 = vector.extract_strided_slice %47 {offsets = [0, 384], sizes = [8, 256], strides = [1, 1]} : vector<8x768xf32> to vector<8x256xf32>
    %cst_11 = arith.constant dense<0.000000e+00> : vector<8xf32>
    %52 = vector.multi_reduction <add>, %51, %cst_11 [1] : vector<8x256xf32> to vector<8xf32>
    %53 = vector.shape_cast %52 : vector<8xf32> to vector<8x1xf32>
    %54 = tpu.concatenate %50, %53 in 1 : vector<8x1xf32>, vector<8x1xf32> -> vector<8x2xf32>
    %cst_12 = arith.constant 3.906250e-03 : f32
    %55 = vector.broadcast %cst_12 : f32 to vector<8x2xf32>
    %56 = arith.mulf %54, %55 : vector<8x2xf32>
    %c0_13 = arith.constant 0 : index
    %c0_14 = arith.constant 0 : index
    %57 = vector.load %arg4[%c0_13, %c0_14] : memref<8x8xbf16, #tpu.memory_space<vmem>>, vector<8x8xbf16>
    %58 = arith.truncf %56 : vector<8x2xf32> to vector<8x2xbf16>
    %cst_15 = arith.constant dense<0.000000e+00> : vector<8x2xf32>
    %59 = tpu.matmul %57, %58, %cst_15 {dimension_numbers = #tpu.dot_dimension_numbers<[1], [0], [0], [1], [0, 0, 1, 1], [], []>} : vector<8x8xbf16>, vector<8x2xbf16>, vector<8x2xf32> -> vector<8x2xf32>
    %c0_16 = arith.constant 0 : index
    %c0_17 = arith.constant 0 : index
    %60 = vector.load %arg5[%c0_16, %c0_17] : memref<8x1xf32, #tpu.memory_space<vmem>>, vector<8x1xf32>
    %61 = vector.broadcast %60 : vector<8x1xf32> to vector<8x2xf32>
    %62 = arith.addf %59, %61 : vector<8x2xf32>
    %63 = arith.negf %62 : vector<8x2xf32>
    %64 = math.exp %63 : vector<8x2xf32>
    %cst_18 = arith.constant 1.000000e+00 : f32
    %65 = vector.broadcast %cst_18 : f32 to vector<8x2xf32>
    %66 = arith.addf %65, %64 : vector<8x2xf32>
    %67 = arith.divf %65, %66 : vector<8x2xf32>
    %68 = vector.extract_strided_slice %47 {offsets = [0, 0], sizes = [8, 256], strides = [1, 1]} : vector<8x768xf32> to vector<8x256xf32>
    %69 = vector.extract_strided_slice %67 {offsets = [0, 0], sizes = [8, 1], strides = [1, 1]} : vector<8x2xf32> to vector<8x1xf32>
    %70 = vector.broadcast %69 : vector<8x1xf32> to vector<8x256xf32>
    %71 = arith.mulf %68, %70 : vector<8x256xf32>
    %72 = arith.truncf %71 : vector<8x256xf32> to vector<8x256xbf16>
    %c0_19 = arith.constant 0 : index
    %c0_20 = arith.constant 0 : index
    %c0_21 = arith.constant 0 : index
    %73 = vector.load %arg6[%c0_19, %c0_20, %c0_21] : memref<2x8x256xbf16, #tpu.memory_space<vmem>>, vector<1x8x256xbf16>
    %74 = vector.shape_cast %73 : vector<1x8x256xbf16> to vector<8x256xbf16>
    %75 = vector.shape_cast %72 : vector<8x256xbf16> to vector<1x8x256xbf16>
    tpu.vector_store %arg6[%c0_19, %c0_20, %c0_21], %75 {strides = array<i32>} : memref<2x8x256xbf16, #tpu.memory_space<vmem>>, vector<1x8x256xbf16>,
    %76 = vector.extract_strided_slice %47 {offsets = [0, 384], sizes = [8, 256], strides = [1, 1]} : vector<8x768xf32> to vector<8x256xf32>
    %77 = vector.extract_strided_slice %67 {offsets = [0, 1], sizes = [8, 1], strides = [1, 1]} : vector<8x2xf32> to vector<8x1xf32>
    %78 = vector.broadcast %77 : vector<8x1xf32> to vector<8x256xf32>
    %79 = arith.mulf %76, %78 : vector<8x256xf32>
    %80 = arith.truncf %79 : vector<8x256xf32> to vector<8x256xbf16>
    %c1 = arith.constant 1 : index
    %c0_22 = arith.constant 0 : index
    %c0_23 = arith.constant 0 : index
    %81 = vector.load %arg6[%c1, %c0_22, %c0_23] : memref<2x8x256xbf16, #tpu.memory_space<vmem>>, vector<1x8x256xbf16>
    %82 = vector.shape_cast %81 : vector<1x8x256xbf16> to vector<8x256xbf16>
    %83 = vector.shape_cast %80 : vector<8x256xbf16> to vector<1x8x256xbf16>
    tpu.vector_store %arg6[%c1, %c0_22, %c0_23], %83 {strides = array<i32>} : memref<2x8x256xbf16, #tpu.memory_space<vmem>>, vector<1x8x256xbf16>,
    return
  }
  func.func @transform_0(%arg0: i32) -> (i32, i32, i32) {
    %c0_i32 = arith.constant 0 : i32
    %c0_i32_0 = arith.constant 0 : i32
    %c0_i32_1 = arith.constant 0 : i32
    return %arg0, %c0_i32, %c0_i32_0 : i32, i32, i32
  }
  func.func @transform_1(%arg0: i32) -> (i32, i32) {
    %c0_i32 = arith.constant 0 : i32
    %c0_i32_0 = arith.constant 0 : i32
    %c0_i32_1 = arith.constant 0 : i32
    return %c0_i32, %c0_i32_0 : i32, i32
  }
  func.func @transform_2(%arg0: i32) -> (i32, i32) {
    %c0_i32 = arith.constant 0 : i32
    %c0_i32_0 = arith.constant 0 : i32
    %c0_i32_1 = arith.constant 0 : i32
    return %c0_i32, %c0_i32_0 : i32, i32
  }
  func.func @transform_3(%arg0: i32) -> (i32, i32) {
    %c0_i32 = arith.constant 0 : i32
    %c0_i32_0 = arith.constant 0 : i32
    %c0_i32_1 = arith.constant 0 : i32
    return %c0_i32, %c0_i32_0 : i32, i32
  }
  func.func @transform_4(%arg0: i32) -> (i32, i32) {
    %c0_i32 = arith.constant 0 : i32
    %c0_i32_0 = arith.constant 0 : i32
    %c0_i32_1 = arith.constant 0 : i32
    return %c0_i32, %c0_i32_0 : i32, i32
  }
  func.func @transform_5(%arg0: i32) -> (i32, i32, i32) {
    %c0_i32 = arith.constant 0 : i32
    %c0_i32_0 = arith.constant 0 : i32
    %c0_i32_1 = arith.constant 0 : i32
    return %arg0, %c0_i32, %c0_i32_0 : i32, i32, i32
  }
}

</mosaic_0001>

<llo_original>
// kernel: tpu_custom_call.1
$region0: #{tpu_custom_call.1}
  #allocation0 [shape = 'u32[]', space=smem, size = 0x4, offset = 0x4, fixed_abs, tag = 'smem constant byte address 0x4 - core index']
  #allocation1 [shape = 'u32[144,128]{1,0:T(1,128)}', space=vmem, size = 0x12000, scoped, tag = 'internal scratch']
  %s0 = inlined_call_operand.vmem [shape: bf16[1,4,896], index: 0, kind: input, shape index: {}]
  %s1 = inlined_call_operand.vmem [shape: bf16[8,36], index: 1, kind: input, shape index: {}]
  %s2 = inlined_call_operand.vmem [shape: f32[8,1], index: 2, kind: input, shape index: {}]
  %s3 = inlined_call_operand.vmem [shape: bf16[8,8], index: 3, kind: input, shape index: {}]
  %s4 = inlined_call_operand.vmem [shape: f32[8,1], index: 4, kind: input, shape index: {}]
  %s5 = inlined_call_operand.hbm [shape: bf16[2,8,256], index: 5, kind: output, shape index: {}]
  %s6 = sld [smem:[#allocation0]]
  $region30: #{tpu_custom_call.1} parent=0
    _
  %s8 = ssub.s32 1, %s6
  %s9 = scalar_select 0, %s8, %s6
  $region1: #{tpu_custom_call.1} parent=0
    #allocation2 [shape = 'u8[8192]{0}', space=vmem, size = 0x2000, scoped, tag = 'output window, operand 0, single buffered']
    #allocation3 [shape = 's32[1]{0}', space=sflag, size = 0x4, scoped, tag = 'scoped memory for tpu_custom_call.1']
    %10 = vsyncpa [#allocation3], 0
    // Predicated region
    $region2: #{tpu_custom_call.1} parent=1 // pred_check
      _
    $region3: #{tpu_custom_call.1} parent=1 // pred_check_branch
      %12 = sbr.rel (0) target = $region5
    $region4: #{tpu_custom_call.1} parent=1 // pred_region
      _
    $region5: #{tpu_custom_call.1} parent=1 // pred_fallthru
      _
    // Predicated region
    $region6: #{tpu_custom_call.1} parent=1 // pred_check
      _
    $region7: #{tpu_custom_call.1} parent=1 // pred_check_branch
      %14 = sbr.rel (0) target = $region9
    $region8: #{tpu_custom_call.1} parent=1 // pred_region
      _
    $region9: #{tpu_custom_call.1} parent=1 // pred_fallthru
      _
    // Predicated region
    $region10: #{tpu_custom_call.1} parent=1 // pred_check
      _
    $region11: #{tpu_custom_call.1} parent=1 // pred_check_branch
      %16 = sbr.rel (0) target = $region13
    $region12: #{tpu_custom_call.1} parent=1 // pred_region
      _
    $region13: #{tpu_custom_call.1} parent=1 // pred_fallthru
      _
    // Predicated region
    $region14: #{tpu_custom_call.1} parent=1 // pred_check
      _
    $region15: #{tpu_custom_call.1} parent=1 // pred_check_branch
      %18 = sbr.rel (0) target = $region17
    $region16: #{tpu_custom_call.1} parent=1 // pred_region
      _
    $region17: #{tpu_custom_call.1} parent=1 // pred_fallthru
      _
    // Predicated region
    $region18: #{tpu_custom_call.1} parent=1 // pred_check
      _
    $region19: #{tpu_custom_call.1} parent=1 // pred_check_branch
      %20 = sbr.rel (0) target = $region21
    $region20: #{tpu_custom_call.1} parent=1 // pred_region
      _
    $region21: #{tpu_custom_call.1} parent=1 // pred_fallthru
      _
    %v22 = vld [vmem:[%s0] sm:$0xff]
    %v23 = vld [vmem:[%s0 + $0x8] sm:$0x3f]
    %v24 = vlaneseq
    %v25 = vand.u32 %v24, 127
    %v26 = vadd.s32 %v25, 128
    %v27 = vadd.s32 %v25, 256
    %v28 = vadd.s32 %v25, 384
    %v29 = vadd.s32 %v25, 512
    %v30 = vadd.s32 %v25, 640
    %v31 = vadd.s32 %v25, 768
    %vm32 = vcmp.lt.s32.totalorder %v25, 0
    %v33 = vsub.s32 0, %v25
    %v34 = vsel %vm32, %v33, %v25
    %v35 = vshrl.u32 %v34, 4
    %v36 = vand.u32 %v34, 15
    %v37 = vsub.s32 0, %v36
    %v38 = vsel %vm32, %v37, %v36
    %vm39 = vcmp.lt.s32.totalorder %v26, 0
    %v40 = vsub.s32 0, %v26
    %v41 = vsel %vm39, %v40, %v26
    %v42 = vshrl.u32 %v41, 4
    %v43 = vand.u32 %v41, 15
    %v44 = vsub.s32 0, %v43
    %v45 = vsel %vm39, %v44, %v43
    %vm46 = vcmp.lt.s32.totalorder %v27, 0
    %v47 = vsub.s32 0, %v27
    %v48 = vsel %vm46, %v47, %v27
    %v49 = vshrl.u32 %v48, 4
    %v50 = vand.u32 %v48, 15
    %v51 = vsub.s32 0, %v50
    %v52 = vsel %vm46, %v51, %v50
    %vm53 = vcmp.lt.s32.totalorder %v28, 0
    %v54 = vsub.s32 0, %v28
    %v55 = vsel %vm53, %v54, %v28
    %v56 = vshrl.u32 %v55, 4
    %v57 = vand.u32 %v55, 15
    %v58 = vsub.s32 0, %v57
    %v59 = vsel %vm53, %v58, %v57
    %vm60 = vcmp.lt.s32.totalorder %v29, 0
    %v61 = vsub.s32 0, %v29
    %v62 = vsel %vm60, %v61, %v29
    %v63 = vshrl.u32 %v62, 4
    %v64 = vand.u32 %v62, 15
    %v65 = vsub.s32 0, %v64
    %v66 = vsel %vm60, %v65, %v64
    %vm67 = vcmp.lt.s32.totalorder %v30, 0
    %v68 = vsub.s32 0, %v30
    %v69 = vsel %vm67, %v68, %v30
    %v70 = vshrl.u32 %v69, 4
    %v71 = vand.u32 %v69, 15
    %v72 = vsub.s32 0, %v71
    %v73 = vsel %vm67, %v72, %v71
    %vm74 = vcmp.lt.s32.totalorder %v31, 0
    %v75 = vsub.s32 0, %v31
    %v76 = vsel %vm74, %v75, %v31
    %v77 = vshrl.u32 %v76, 4
    %v78 = vand.u32 %v76, 15
    %v79 = vsub.s32 0, %v78
    %v80 = vsel %vm74, %v79, %v78
    %vm81 = vcmp.ne.s32.totalorder %v38, 0
    %vm82 = vcmp.ne.s32.totalorder %v45, 0
    %vm83 = vcmp.ne.s32.totalorder %v52, 0
    %vm84 = vcmp.ne.s32.totalorder %v59, 0
    %vm85 = vcmp.ne.s32.totalorder %v66, 0
    %vm86 = vcmp.ne.s32.totalorder %v73, 0
    %vm87 = vcmp.ne.s32.totalorder %v80, 0
    %vm88 = vcmp.lt.s32.totalorder %v38, 0
    %vm89 = vcmp.lt.s32.totalorder %v45, 0
    %vm90 = vcmp.lt.s32.totalorder %v52, 0
    %vm91 = vcmp.lt.s32.totalorder %v59, 0
    %vm92 = vcmp.lt.s32.totalorder %v66, 0
    %vm93 = vcmp.lt.s32.totalorder %v73, 0
    %vm94 = vcmp.lt.s32.totalorder %v80, 0
    %vm95 = vmand %vm88, %vm81
    %vm96 = vmand %vm89, %vm82
    %vm97 = vmand %vm90, %vm83
    %vm98 = vmand %vm91, %vm84
    %vm99 = vmand %vm92, %vm85
    %vm100 = vmand %vm93, %vm86
    %vm101 = vmand %vm94, %vm87
    %v102 = vadd.s32 %v38, 16
    %v103 = vadd.s32 %v45, 16
    %v104 = vadd.s32 %v52, 16
    %v105 = vadd.s32 %v59, 16
    %v106 = vadd.s32 %v66, 16
    %v107 = vadd.s32 %v73, 16
    %v108 = vadd.s32 %v80, 16
    %v109 = vsel %vm95, %v102, %v38
    %v110 = vsel %vm96, %v103, %v45
    %v111 = vsel %vm97, %v104, %v52
    %v112 = vsel %vm98, %v105, %v59
    %v113 = vsel %vm99, %v106, %v66
    %v114 = vsel %vm100, %v107, %v73
    %v115 = vsel %vm101, %v108, %v80
    %vm116 = vcmp.ne.s32.totalorder %v109, 15
    %vm117 = vcmp.ne.s32.totalorder %v110, 15
    %vm118 = vcmp.ne.s32.totalorder %v111, 15
    %vm119 = vcmp.ne.s32.totalorder %v112, 15
    %vm120 = vcmp.ne.s32.totalorder %v113, 15
    %vm121 = vcmp.ne.s32.totalorder %v114, 15
    %vm122 = vcmp.ne.s32.totalorder %v115, 15
    %v123 = vsel %vm116, 1, 0
    %v124 = vsel %vm117, 1, 0
    %v125 = vsel %vm118, 1, 0
    %v126 = vsel %vm119, 1, 0
    %v127 = vsel %vm120, 1, 0
    %v128 = vsel %vm121, 1, 0
    %v129 = vsel %vm122, 1, 0
    %v130 = vcvt.s32.f32 %v123
    %v131 = vcvt.s32.f32 %v124
    %v132 = vcvt.s32.f32 %v125
    %v133 = vcvt.s32.f32 %v126
    %v134 = vcvt.s32.f32 %v127
    %v135 = vcvt.s32.f32 %v128
    %v136 = vcvt.s32.f32 %v129
    %v137 = vpack.c.bf16 %v130, %v130
    %v138 = vpack.c.bf16 %v131, %v131
    %v139 = vpack.c.bf16 %v132, %v132
    %v140 = vpack.c.bf16 %v133, %v133
    %v141 = vpack.c.bf16 %v134, %v134
    %v142 = vpack.c.bf16 %v135, %v135
    %v143 = vpack.c.bf16 %v136, %v136
    %v151 = vcombine.low %v137, %v138
    %v152 = vcombine.low %v139, %v140
    %v154 = vunpack.c.l.s4 1983009808
    %v155 = vunpack.c.0.s8 %v154
    %v156 = vlaneseq
    %v157 = vshrl.u32 %v156, 7
    %v158 = vsub.s32 %v155, %v157
    %v159 = vrot.slane %v151, %v158
    %v161 = vunpack.c.l.s4 1983009808
    %v162 = vunpack.c.0.s8 %v161
    %v163 = vlaneseq
    %v164 = vshrl.u32 %v163, 7
    %v165 = vsub.s32 %v162, %v164
    %v166 = vrot.slane %v152, %v165
    %v167 = vcombine.low %v159, %v166
    %v168 = vcombine.low %v141, %v142
    %v170 = vunpack.c.l.s4 1983009808
    %v171 = vunpack.c.0.s8 %v170
    %v172 = vlaneseq
    %v173 = vshrl.u32 %v172, 7
    %v174 = vsub.s32 %v171, %v173
    %v175 = vrot.slane %v168, %v174
    %v177 = vunpack.c.l.s4 1983009808
    %v178 = vunpack.c.0.s8 %v177
    %v179 = vlaneseq
    %v180 = vshrl.u32 %v179, 7
    %v181 = vsub.s32 %v178, %v180
    %v182 = vrot.slane %v143, %v181
    %v183 = vcombine.low %v175, %v182
    %v186 = vmul.bf16 %v22, %v167
    %v187 = vmul.bf16 %v23, %v183
    %vm188 = vcmp.ne.s32.totalorder %v109, 0
    %vm189 = vcmp.ne.s32.totalorder %v110, 0
    %vm190 = vcmp.ne.s32.totalorder %v111, 0
    %vm191 = vcmp.ne.s32.totalorder %v112, 0
    %vm192 = vcmp.ne.s32.totalorder %v113, 0
    %vm193 = vcmp.ne.s32.totalorder %v114, 0
    %vm194 = vcmp.ne.s32.totalorder %v115, 0
    %v195 = vsel %vm188, 1, 0
    %v196 = vsel %vm189, 1, 0
    %v197 = vsel %vm190, 1, 0
    %v198 = vsel %vm191, 1, 0
    %v199 = vsel %vm192, 1, 0
    %v200 = vsel %vm193, 1, 0
    %v201 = vsel %vm194, 1, 0
    %v202 = vcvt.s32.f32 %v195
    %v203 = vcvt.s32.f32 %v196
    %v204 = vcvt.s32.f32 %v197
    %v205 = vcvt.s32.f32 %v198
    %v206 = vcvt.s32.f32 %v199
    %v207 = vcvt.s32.f32 %v200
    %v208 = vcvt.s32.f32 %v201
    %v209 = vpack.c.bf16 %v202, %v202
    %v210 = vpack.c.bf16 %v203, %v203
    %v211 = vpack.c.bf16 %v204, %v204
    %v212 = vpack.c.bf16 %v205, %v205
    %v213 = vpack.c.bf16 %v206, %v206
    %v214 = vpack.c.bf16 %v207, %v207
    %v215 = vpack.c.bf16 %v208, %v208
    %v223 = vcombine.low %v209, %v210
    %v224 = vcombine.low %v211, %v212
    %v226 = vunpack.c.l.s4 1983009808
    %v227 = vunpack.c.0.s8 %v226
    %v228 = vlaneseq
    %v229 = vshrl.u32 %v228, 7
    %v230 = vsub.s32 %v227, %v229
    %v231 = vrot.slane %v223, %v230
    %v233 = vunpack.c.l.s4 1983009808
    %v234 = vunpack.c.0.s8 %v233
    %v235 = vlaneseq
    %v236 = vshrl.u32 %v235, 7
    %v237 = vsub.s32 %v234, %v236
    %v238 = vrot.slane %v224, %v237
    %v239 = vcombine.low %v231, %v238
    %v240 = vcombine.low %v213, %v214
    %v242 = vunpack.c.l.s4 1983009808
    %v243 = vunpack.c.0.s8 %v242
    %v244 = vlaneseq
    %v245 = vshrl.u32 %v244, 7
    %v246 = vsub.s32 %v243, %v245
    %v247 = vrot.slane %v240, %v246
    %v249 = vunpack.c.l.s4 1983009808
    %v250 = vunpack.c.0.s8 %v249
    %v251 = vlaneseq
    %v252 = vshrl.u32 %v251, 7
    %v253 = vsub.s32 %v250, %v252
    %v254 = vrot.slane %v215, %v253
    %v255 = vcombine.low %v247, %v254
    %v258 = vmul.bf16 %v22, %v239
    %v259 = vmul.bf16 %v23, %v255
    %v262 = vcombine.high %v186, %v186
    %v264 = vunpack.c.l.s4 1983009808
    %v265 = vunpack.c.0.s8 %v264
    %v266 = vlaneseq
    %v267 = vshrl.u32 %v266, 7
    %v268 = vsub.s32 %v265, %v267
    %v269 = vrot.slane %v186, %v268
    %v271 = vunpack.c.l.s4 1983009808
    %v272 = vunpack.c.0.s8 %v271
    %v273 = vlaneseq
    %v274 = vshrl.u32 %v273, 7
    %v275 = vsub.s32 %v272, %v274
    %v276 = vrot.slane %v262, %v275
    %v277 = vcombine.high %v269, %v269
    %v278 = vcombine.high %v276, %v276
    %v279 = vcombine.high %v187, %v187
    %v281 = vunpack.c.l.s4 1983009808
    %v282 = vunpack.c.0.s8 %v281
    %v283 = vlaneseq
    %v284 = vshrl.u32 %v283, 7
    %v285 = vsub.s32 %v282, %v284
    %v286 = vrot.slane %v187, %v285
    %v288 = vunpack.c.l.s4 1983009808
    %v289 = vunpack.c.0.s8 %v288
    %v290 = vlaneseq
    %v291 = vshrl.u32 %v290, 7
    %v292 = vsub.s32 %v289, %v291
    %v293 = vrot.slane %v279, %v292
    %v294 = vcombine.high %v286, %v286
    %v297 = vcombine.low %v22, %v22
    %v299 = vunpack.c.l.s4 1983009808
    %v300 = vunpack.c.0.s8 %v299
    %v301 = vlaneseq
    %v302 = vshrl.u32 %v301, 7
    %v303 = vsub.s32 %v300, %v302
    %v304 = vrot.slane %v297, %v303
    %v306 = vunpack.c.l.s4 1983009808
    %v307 = vunpack.c.0.s8 %v306
    %v308 = vlaneseq
    %v309 = vshrl.u32 %v308, 7
    %v310 = vsub.s32 %v307, %v309
    %v311 = vrot.slane %v22, %v310
    %v312 = vcombine.high %v304, %v304
    %v313 = vcombine.high %v311, %v311
    %v314 = vcombine.low %v23, %v23
    %v316 = vunpack.c.l.s4 1983009808
    %v317 = vunpack.c.0.s8 %v316
    %v318 = vlaneseq
    %v319 = vshrl.u32 %v318, 7
    %v320 = vsub.s32 %v317, %v319
    %v321 = vrot.slane %v314, %v320
    %v323 = vunpack.c.l.s4 1983009808
    %v324 = vunpack.c.0.s8 %v323
    %v325 = vlaneseq
    %v326 = vshrl.u32 %v325, 7
    %v327 = vsub.s32 %v324, %v326
    %v328 = vrot.slane %v23, %v327
    %v329 = vcombine.high %v321, %v321
    %330 = vrot.lane.b32.xlu0 %v304, 127
    %v331 = vpop.permute.xlu0 %330
    %332 = vrot.lane.b32.xlu0 %v312, 127
    %v333 = vpop.permute.xlu0 %332
    %334 = vrot.lane.b32.xlu0 %v311, 127
    %v335 = vpop.permute.xlu0 %334
    %336 = vrot.lane.b32.xlu0 %v313, 127
    %v337 = vpop.permute.xlu0 %336
    %338 = vrot.lane.b32.xlu0 %v321, 127
    %v339 = vpop.permute.xlu0 %338
    %340 = vrot.lane.b32.xlu0 %v329, 127
    %v341 = vpop.permute.xlu0 %340
    %342 = vrot.lane.b32.xlu0 %v328, 127
    %v343 = vpop.permute.xlu0 %342
    %vm344 = vcmask 1039360
    %v345 = vsel %vm344, %v331, %v333
    %v346 = vsel %vm344, %v333, %v335
    %v347 = vsel %vm344, %v335, %v337
    %v348 = vsel %vm344, %v337, %v339
    %v349 = vsel %vm344, %v339, %v341
    %v350 = vsel %vm344, %v341, %v343
    %v353 = vcombine.high %v258, %v258
    %v355 = vunpack.c.l.s4 1983009808
    %v356 = vunpack.c.0.s8 %v355
    %v357 = vlaneseq
    %v358 = vshrl.u32 %v357, 7
    %v359 = vsub.s32 %v356, %v358
    %v360 = vrot.slane %v258, %v359
    %v362 = vunpack.c.l.s4 1983009808
    %v363 = vunpack.c.0.s8 %v362
    %v364 = vlaneseq
    %v365 = vshrl.u32 %v364, 7
    %v366 = vsub.s32 %v363, %v365
    %v367 = vrot.slane %v353, %v366
    %v368 = vcombine.low %v360, %v360
    %v369 = vcombine.low %v367, %v367
    %v370 = vcombine.high %v259, %v259
    %v372 = vunpack.c.l.s4 1983009808
    %v373 = vunpack.c.0.s8 %v372
    %v374 = vlaneseq
    %v375 = vshrl.u32 %v374, 7
    %v376 = vsub.s32 %v373, %v375
    %v377 = vrot.slane %v259, %v376
    %v379 = vunpack.c.l.s4 1983009808
    %v380 = vunpack.c.0.s8 %v379
    %v381 = vlaneseq
    %v382 = vshrl.u32 %v381, 7
    %v383 = vsub.s32 %v380, %v382
    %v384 = vrot.slane %v370, %v383
    %v385 = vcombine.low %v377, %v377
    %v386 = vcombine.low %v384, %v384
    %387 = vrot.lane.b32.xlu0 %v368, 126
    %v388 = vpop.permute.xlu0 %387
    %389 = vrot.lane.b32.xlu0 %v360, 126
    %v390 = vpop.permute.xlu0 %389
    %391 = vrot.lane.b32.xlu0 %v369, 126
    %v392 = vpop.permute.xlu0 %391
    %393 = vrot.lane.b32.xlu0 %v367, 126
    %v394 = vpop.permute.xlu0 %393
    %395 = vrot.lane.b32.xlu0 %v385, 126
    %v396 = vpop.permute.xlu0 %395
    %397 = vrot.lane.b32.xlu0 %v377, 126
    %v398 = vpop.permute.xlu0 %397
    %399 = vrot.lane.b32.xlu0 %v386, 126
    %v400 = vpop.permute.xlu0 %399
    %vm401 = vcmask 1031168
    %v402 = vsel %vm401, %v388, %v390
    %v403 = vsel %vm401, %v390, %v392
    %v404 = vsel %vm401, %v392, %v394
    %v405 = vsel %vm401, %v394, %v396
    %v406 = vsel %vm401, %v396, %v398
    %v407 = vsel %vm401, %v398, %v400
    %v408 = vcombine.low %v186, %v186
    %v410 = vunpack.c.l.s4 1983009808
    %v411 = vunpack.c.0.s8 %v410
    %v412 = vlaneseq
    %v413 = vshrl.u32 %v412, 7
    %v414 = vsub.s32 %v411, %v413
    %v415 = vrot.slane %v408, %v414
    %v416 = vcombine.low %v415, %v415
    %v417 = vcombine.low %v269, %v269
    %v418 = vcombine.low %v187, %v187
    %v420 = vunpack.c.l.s4 1983009808
    %v421 = vunpack.c.0.s8 %v420
    %v422 = vlaneseq
    %v423 = vshrl.u32 %v422, 7
    %v424 = vsub.s32 %v421, %v423
    %v425 = vrot.slane %v418, %v424
    %v426 = vcombine.low %v425, %v425
    %v427 = vcombine.low %v286, %v286
    %428 = vrot.lane.b32.xlu0 %v416, 112
    %v429 = vpop.permute.xlu0 %428
    %430 = vrot.lane.b32.xlu0 %v415, 112
    %v431 = vpop.permute.xlu0 %430
    %432 = vrot.lane.b32.xlu0 %v417, 112
    %v433 = vpop.permute.xlu0 %432
    %434 = vrot.lane.b32.xlu0 %v269, 112
    %v435 = vpop.permute.xlu0 %434
    %436 = vrot.lane.b32.xlu0 %v426, 112
    %v437 = vpop.permute.xlu0 %436
    %438 = vrot.lane.b32.xlu0 %v425, 112
    %v439 = vpop.permute.xlu0 %438
    %440 = vrot.lane.b32.xlu0 %v427, 112
    %v441 = vpop.permute.xlu0 %440
    %vm442 = vcmask 916480
    %v443 = vsel %vm442, %v429, %v431
    %v444 = vsel %vm442, %v431, %v433
    %v445 = vsel %vm442, %v433, %v435
    %v446 = vsel %vm442, %v435, %v437
    %v447 = vsel %vm442, %v437, %v439
    %v448 = vsel %vm442, %v439, %v441
    %v449 = vcombine.high %v22, %v22
    %v451 = vunpack.c.l.s4 1983009808
    %v452 = vunpack.c.0.s8 %v451
    %v453 = vlaneseq
    %v454 = vshrl.u32 %v453, 7
    %v455 = vsub.s32 %v452, %v454
    %v456 = vrot.slane %v449, %v455
    %v457 = vcombine.high %v456, %v456
    %v458 = vcombine.high %v23, %v23
    %v460 = vunpack.c.l.s4 1983009808
    %v461 = vunpack.c.0.s8 %v460
    %v462 = vlaneseq
    %v463 = vshrl.u32 %v462, 7
    %v464 = vsub.s32 %v461, %v463
    %v465 = vrot.slane %v458, %v464
    %v466 = vcombine.high %v328, %v328
    %467 = vrot.lane.b32.xlu0 %v311, 111
    %v468 = vpop.permute.xlu0 %467
    %469 = vrot.lane.b32.xlu0 %v313, 111
    %v470 = vpop.permute.xlu0 %469
    %471 = vrot.lane.b32.xlu0 %v456, 111
    %v472 = vpop.permute.xlu0 %471
    %473 = vrot.lane.b32.xlu0 %v457, 111
    %v474 = vpop.permute.xlu0 %473
    %475 = vrot.lane.b32.xlu0 %v328, 111
    %v476 = vpop.permute.xlu0 %475
    %477 = vrot.lane.b32.xlu0 %v466, 111
    %v478 = vpop.permute.xlu0 %477
    %479 = vrot.lane.b32.xlu0 %v465, 111
    %v480 = vpop.permute.xlu0 %479
    %vm481 = vcmask 908288
    %v482 = vsel %vm481, %v468, %v470
    %v483 = vsel %vm481, %v470, %v472
    %v484 = vsel %vm481, %v472, %v474
    %v485 = vsel %vm481, %v474, %v476
    %v486 = vsel %vm481, %v476, %v478
    %v487 = vsel %vm481, %v478, %v480
    %v488 = vcombine.low %v258, %v258
    %v490 = vunpack.c.l.s4 1983009808
    %v491 = vunpack.c.0.s8 %v490
    %v492 = vlaneseq
    %v493 = vshrl.u32 %v492, 7
    %v494 = vsub.s32 %v491, %v493
    %v495 = vrot.slane %v488, %v494
    %v496 = vcombine.high %v495, %v495
    %v497 = vcombine.high %v360, %v360
    %v498 = vcombine.low %v259, %v259
    %v500 = vunpack.c.l.s4 1983009808
    %v501 = vunpack.c.0.s8 %v500
    %v502 = vlaneseq
    %v503 = vshrl.u32 %v502, 7
    %v504 = vsub.s32 %v501, %v503
    %v505 = vrot.slane %v498, %v504
    %v506 = vcombine.high %v505, %v505
    %507 = vrot.lane.b32.xlu0 %v495, 110
    %v508 = vpop.permute.xlu0 %507
    %509 = vrot.lane.b32.xlu0 %v496, 110
    %v510 = vpop.permute.xlu0 %509
    %511 = vrot.lane.b32.xlu0 %v360, 110
    %v512 = vpop.permute.xlu0 %511
    %513 = vrot.lane.b32.xlu0 %v497, 110
    %v514 = vpop.permute.xlu0 %513
    %515 = vrot.lane.b32.xlu0 %v505, 110
    %v516 = vpop.permute.xlu0 %515
    %517 = vrot.lane.b32.xlu0 %v506, 110
    %v518 = vpop.permute.xlu0 %517
    %519 = vrot.lane.b32.xlu0 %v377, 110
    %v520 = vpop.permute.xlu0 %519
    %vm521 = vcmask 900096
    %v522 = vsel %vm521, %v508, %v510
    %v523 = vsel %vm521, %v510, %v512
    %v524 = vsel %vm521, %v512, %v514
    %v525 = vsel %vm521, %v514, %v516
    %v526 = vsel %vm521, %v516, %v518
    %v527 = vsel %vm521, %v518, %v520
    %v528 = vcombine.low %v276, %v276
    %v529 = vcombine.low %v293, %v293
    %530 = vrot.lane.b32.xlu0 %v417, 96
    %v531 = vpop.permute.xlu0 %530
    %532 = vrot.lane.b32.xlu0 %v269, 96
    %v533 = vpop.permute.xlu0 %532
    %534 = vrot.lane.b32.xlu0 %v528, 96
    %v535 = vpop.permute.xlu0 %534
    %536 = vrot.lane.b32.xlu0 %v276, 96
    %v537 = vpop.permute.xlu0 %536
    %538 = vrot.lane.b32.xlu0 %v427, 96
    %v539 = vpop.permute.xlu0 %538
    %540 = vrot.lane.b32.xlu0 %v286, 96
    %v541 = vpop.permute.xlu0 %540
    %542 = vrot.lane.b32.xlu0 %v529, 96
    %v543 = vpop.permute.xlu0 %542
    %vm544 = vcmask 785408
    %v545 = vsel %vm544, %v531, %v533
    %v546 = vsel %vm544, %v533, %v535
    %v547 = vsel %vm544, %v535, %v537
    %v548 = vsel %vm544, %v537, %v539
    %v549 = vsel %vm544, %v539, %v541
    %v550 = vsel %vm544, %v541, %v543
    %v551 = vcombine.low %v304, %v304
    %v552 = vcombine.low %v311, %v311
    %v553 = vcombine.low %v321, %v321
    %v554 = vcombine.low %v328, %v328
    %555 = vrot.lane.b32.xlu0 %v551, 95
    %v556 = vpop.permute.xlu0 %555
    %557 = vrot.lane.b32.xlu0 %v304, 95
    %v558 = vpop.permute.xlu0 %557
    %559 = vrot.lane.b32.xlu0 %v552, 95
    %v560 = vpop.permute.xlu0 %559
    %561 = vrot.lane.b32.xlu0 %v311, 95
    %v562 = vpop.permute.xlu0 %561
    %563 = vrot.lane.b32.xlu0 %v553, 95
    %v564 = vpop.permute.xlu0 %563
    %565 = vrot.lane.b32.xlu0 %v321, 95
    %v566 = vpop.permute.xlu0 %565
    %567 = vrot.lane.b32.xlu0 %v554, 95
    %v568 = vpop.permute.xlu0 %567
    %vm569 = vcmask 777216
    %v570 = vsel %vm569, %v556, %v558
    %v571 = vsel %vm569, %v558, %v560
    %v572 = vsel %vm569, %v560, %v562
    %v573 = vsel %vm569, %v562, %v564
    %v574 = vsel %vm569, %v564, %v566
    %v575 = vsel %vm569, %v566, %v568
    %v576 = vcombine.high %v367, %v367
    %v577 = vcombine.high %v377, %v377
    %578 = vrot.lane.b32.xlu0 %v360, 94
    %v579 = vpop.permute.xlu0 %578
    %580 = vrot.lane.b32.xlu0 %v497, 94
    %v581 = vpop.permute.xlu0 %580
    %582 = vrot.lane.b32.xlu0 %v367, 94
    %v583 = vpop.permute.xlu0 %582
    %584 = vrot.lane.b32.xlu0 %v576, 94
    %v585 = vpop.permute.xlu0 %584
    %586 = vrot.lane.b32.xlu0 %v377, 94
    %v587 = vpop.permute.xlu0 %586
    %588 = vrot.lane.b32.xlu0 %v577, 94
    %v589 = vpop.permute.xlu0 %588
    %590 = vrot.lane.b32.xlu0 %v384, 94
    %v591 = vpop.permute.xlu0 %590
    %vm592 = vcmask 769024
    %v593 = vsel %vm592, %v579, %v581
    %v594 = vsel %vm592, %v581, %v583
    %v595 = vsel %vm592, %v583, %v585
    %v596 = vsel %vm592, %v585, %v587
    %v597 = vsel %vm592, %v587, %v589
    %v598 = vsel %vm592, %v589, %v591
    %vm599 = vcmask 1041408
    %v602 = vsel %vm599, %v269, %v345
    %v605 = vsel %vm599, %v277, %v346
    %v608 = vsel %vm599, %v276, %v347
    %v611 = vsel %vm599, %v278, %v348
    %v614 = vsel %vm599, %v286, %v349
    %v617 = vsel %vm599, %v294, %v350
    %v620 = vsel %vm599, %v293, %v343
    %vm621 = vcmask 1043456
    %v623 = vsel %vm621, %v602, %v402
    %v625 = vsel %vm621, %v605, %v403
    %v627 = vsel %vm621, %v608, %v404
    %v629 = vsel %vm621, %v611, %v405
    %v631 = vsel %vm621, %v614, %v406
    %v633 = vsel %vm621, %v617, %v407
    %v635 = vsel %vm621, %v620, %v400
    %vm636 = vcmask 1045504
    %v638 = vsel %vm636, %v623, %v443
    %v640 = vsel %vm636, %v625, %v444
    %v642 = vsel %vm636, %v627, %v445
    %v644 = vsel %vm636, %v629, %v446
    %v646 = vsel %vm636, %v631, %v447
    %v648 = vsel %vm636, %v633, %v448
    %v650 = vsel %vm636, %v635, %v441
    %v653 = vsel %vm599, %v482, %v522
    %v656 = vsel %vm599, %v483, %v523
    %v659 = vsel %vm599, %v484, %v524
    %v662 = vsel %vm599, %v485, %v525
    %v665 = vsel %vm599, %v486, %v526
    %v668 = vsel %vm599, %v487, %v527
    %v671 = vsel %vm599, %v480, %v520
    %v673 = vsel %vm621, %v653, %v545
    %v675 = vsel %vm621, %v656, %v546
    %v677 = vsel %vm621, %v659, %v547
    %v679 = vsel %vm621, %v662, %v548
    %v681 = vsel %vm621, %v665, %v549
    %v683 = vsel %vm621, %v668, %v550
    %v685 = vsel %vm621, %v671, %v543
    %v687 = vsel %vm636, %v673, %v570
    %v689 = vsel %vm636, %v675, %v571
    %v691 = vsel %vm636, %v677, %v572
    %v693 = vsel %vm636, %v679, %v573
    %v695 = vsel %vm636, %v681, %v574
    %v697 = vsel %vm636, %v683, %v575
    %v699 = vsel %vm636, %v685, %v568
    %v700 = vld [vmem:[%s1] sm:$0xf]
    %v701 = vld [vmem:[%s2] sm:$0xff]
    %703 = vset.pattern.permute.xlu0 0
    %704 = vperm.xlu0 %703, %v701
    %v705 = vpop.permute.xlu0 %704
    %721 = vrot.lane.b32.xlu0 %v638, 113
    %v722 = vpop.permute.xlu0 %721
    %723 = vrot.lane.b32.xlu0 %v640, 113
    %v724 = vpop.permute.xlu0 %723
    %725 = vrot.lane.b32.xlu0 %v642, 113
    %v726 = vpop.permute.xlu0 %725
    %727 = vrot.lane.b32.xlu0 %v644, 113
    %v728 = vpop.permute.xlu0 %727
    %729 = vrot.lane.b32.xlu0 %v646, 113
    %v730 = vpop.permute.xlu0 %729
    %731 = vrot.lane.b32.xlu0 %v648, 113
    %v732 = vpop.permute.xlu0 %731
    %733 = vrot.lane.b32.xlu0 %v650, 113
    %v734 = vpop.permute.xlu0 %733
    %735 = vrot.lane.b32.xlu0 %v687, 113
    %v736 = vpop.permute.xlu0 %735
    %737 = vrot.lane.b32.xlu0 %v689, 113
    %v738 = vpop.permute.xlu0 %737
    %739 = vrot.lane.b32.xlu0 %v691, 113
    %v740 = vpop.permute.xlu0 %739
    %741 = vrot.lane.b32.xlu0 %v693, 113
    %v742 = vpop.permute.xlu0 %741
    %743 = vrot.lane.b32.xlu0 %v695, 113
    %v744 = vpop.permute.xlu0 %743
    %745 = vrot.lane.b32.xlu0 %v697, 113
    %v746 = vpop.permute.xlu0 %745
    %747 = vrot.lane.b32.xlu0 %v699, 113
    %v748 = vpop.permute.xlu0 %747
    %749 = vrot.lane.b32.xlu0 %v593, 113
    %v750 = vpop.permute.xlu0 %749
    %751 = vrot.lane.b32.xlu0 %v594, 113
    %v752 = vpop.permute.xlu0 %751
    %753 = vrot.lane.b32.xlu0 %v595, 113
    %v754 = vpop.permute.xlu0 %753
    %755 = vrot.lane.b32.xlu0 %v596, 113
    %v756 = vpop.permute.xlu0 %755
    %757 = vrot.lane.b32.xlu0 %v597, 113
    %v758 = vpop.permute.xlu0 %757
    %759 = vrot.lane.b32.xlu0 %v598, 113
    %v760 = vpop.permute.xlu0 %759
    %761 = vrot.lane.b32.xlu0 %v591, 113
    %v762 = vpop.permute.xlu0 %761
    %vm763 = vcmask 924672
    %v764 = vsel %vm763, %v722, %v724
    %v765 = vsel %vm763, %v724, %v726
    %v766 = vsel %vm763, %v726, %v728
    %v767 = vsel %vm763, %v728, %v730
    %v768 = vsel %vm763, %v730, %v732
    %v769 = vsel %vm763, %v732, %v734
    %v770 = vsel %vm763, %v736, %v738
    %v771 = vsel %vm763, %v738, %v740
    %v772 = vsel %vm763, %v740, %v742
    %v773 = vsel %vm763, %v742, %v744
    %v774 = vsel %vm763, %v744, %v746
    %v775 = vsel %vm763, %v746, %v748
    %v776 = vsel %vm763, %v750, %v752
    %v777 = vsel %vm763, %v752, %v754
    %v778 = vsel %vm763, %v754, %v756
    %v779 = vsel %vm763, %v756, %v758
    %v780 = vsel %vm763, %v758, %v760
    %v781 = vsel %vm763, %v760, %v762
    %vm794 = vcmask 293888
    %v796 = vsel %vm794, %v700, 0
    %v799 = vsel %vm599, %v776, 0
    %v802 = vsel %vm599, %v777, 0
    %v805 = vsel %vm599, %v778, 0
    %v808 = vsel %vm599, %v779, 0
    %v811 = vsel %vm599, %v780, 0
    %v814 = vsel %vm599, %v781, 0
    %816 = vmatprep.subr.bf16.mxu0 0
    %817 = vmatpush1.bf16.msra.mxu0 0
    %818 = vmatprep.subr.bf16.mxu0 0
    %819 = vmatpush1.bf16.msra.mxu0 0
    %820 = vmatprep.subr.bf16.mxu0 0
    %821 = vmatpush1.bf16.msra.mxu0 0
    %822 = vmatprep.subr.bf16.mxu0 0
    %823 = vmatpush1.bf16.msra.mxu0 0
    %824 = vmatprep.subr.bf16.mxu0 0
    %825 = vmatpush1.bf16.msra.mxu0 0
    %826 = vmatprep.subr.bf16.mxu0 %v802
    %827 = vmatpush1.bf16.msra.mxu0 %v799
    %828 = vmatprep.subr.bf16.mxu0 %v771
    %829 = vmatpush1.bf16.msra.mxu0 %v770
    %830 = vmatprep.subr.bf16.mxu0 %v765
    %831 = vmatpush1.bf16.msra.mxu0 %v764
    %832 = vmatprep.subr.bf16.mxu0 0
    %833 = vmatpush2.bf16.msra.mxu0 0
    %834 = vmatprep.subr.bf16.mxu0 0
    %835 = vmatpush2.bf16.msra.mxu0 0
    %836 = vmatprep.subr.bf16.mxu0 0
    %837 = vmatpush2.bf16.msra.mxu0 0
    %838 = vmatprep.subr.bf16.mxu0 0
    %839 = vmatpush2.bf16.msra.mxu0 0
    %840 = vmatprep.subr.bf16.mxu0 0
    %841 = vmatpush2.bf16.msra.mxu0 0
    %842 = vmatprep.subr.bf16.mxu0 0
    %843 = vmatpush2.bf16.msra.mxu0 0
    %844 = vmatprep.subr.bf16.mxu0 0
    %845 = vmatpush2.bf16.msra.mxu0 0
    %846 = vmatprep.subr.bf16.mxu0 0
    %847 = vmatpush2.bf16.msra.mxu0 0
    %848 = vmatprep.mubr.bf16.mxu0 0
    %849 = vmatmul.mubr.bf16.gmra.mxu0 %v796
    %v850 = vpop.f32.mrf.mxu0
    %v851 = vadd.f32 %v705, %v850
    %v852 = vpop.f32.mrf.mxu0
    %v853 = vadd.f32 %v705, %v852
    %v854 = vpop.f32.mrf.mxu0
    %v855 = vpop.f32.mrf.mxu0
    %856 = vdwg.mxu0
    %857 = vmatprep.subr.bf16.mxu0 0
    %858 = vmatpush1.bf16.msra.mxu0 0
    %859 = vmatprep.subr.bf16.mxu0 0
    %860 = vmatpush1.bf16.msra.mxu0 0
    %861 = vmatprep.subr.bf16.mxu0 0
    %862 = vmatpush1.bf16.msra.mxu0 0
    %863 = vmatprep.subr.bf16.mxu0 0
    %864 = vmatpush1.bf16.msra.mxu0 0
    %865 = vmatprep.subr.bf16.mxu0 0
    %866 = vmatpush1.bf16.msra.mxu0 0
    %867 = vmatprep.subr.bf16.mxu0 %v808
    %868 = vmatpush1.bf16.msra.mxu0 %v805
    %869 = vmatprep.subr.bf16.mxu0 %v773
    %870 = vmatpush1.bf16.msra.mxu0 %v772
    %871 = vmatprep.subr.bf16.mxu0 %v767
    %872 = vmatpush1.bf16.msra.mxu0 %v766
    %873 = vmatprep.subr.bf16.mxu0 0
    %874 = vmatpush2.bf16.msra.mxu0 0
    %875 = vmatprep.subr.bf16.mxu0 0
    %876 = vmatpush2.bf16.msra.mxu0 0
    %877 = vmatprep.subr.bf16.mxu0 0
    %878 = vmatpush2.bf16.msra.mxu0 0
    %879 = vmatprep.subr.bf16.mxu0 0
    %880 = vmatpush2.bf16.msra.mxu0 0
    %881 = vmatprep.subr.bf16.mxu0 0
    %882 = vmatpush2.bf16.msra.mxu0 0
    %883 = vmatprep.subr.bf16.mxu0 0
    %884 = vmatpush2.bf16.msra.mxu0 0
    %885 = vmatprep.subr.bf16.mxu0 0
    %886 = vmatpush2.bf16.msra.mxu0 0
    %887 = vmatprep.subr.bf16.mxu0 0
    %888 = vmatpush2.bf16.msra.mxu0 0
    %889 = vmatprep.mubr.bf16.mxu0 0
    %890 = vmatmul.mubr.bf16.gmra.mxu0 %v796
    %v891 = vpop.f32.mrf.mxu0
    %v892 = vpop.f32.mrf.mxu0
    %v893 = vadd.f32 %v705, %v892
    %v894 = vpop.f32.mrf.mxu0
    %v895 = vpop.f32.mrf.mxu0
    %896 = vdwg.mxu0
    %897 = vmatprep.subr.bf16.mxu0 0
    %898 = vmatpush1.bf16.msra.mxu0 0
    %899 = vmatprep.subr.bf16.mxu0 0
    %900 = vmatpush1.bf16.msra.mxu0 0
    %901 = vmatprep.subr.bf16.mxu0 0
    %902 = vmatpush1.bf16.msra.mxu0 0
    %903 = vmatprep.subr.bf16.mxu0 0
    %904 = vmatpush1.bf16.msra.mxu0 0
    %905 = vmatprep.subr.bf16.mxu0 0
    %906 = vmatpush1.bf16.msra.mxu0 0
    %907 = vmatprep.subr.bf16.mxu0 %v814
    %908 = vmatpush1.bf16.msra.mxu0 %v811
    %909 = vmatprep.subr.bf16.mxu0 %v775
    %910 = vmatpush1.bf16.msra.mxu0 %v774
    %911 = vmatprep.subr.bf16.mxu0 %v769
    %912 = vmatpush1.bf16.msra.mxu0 %v768
    %913 = vmatprep.subr.bf16.mxu0 0
    %914 = vmatpush2.bf16.msra.mxu0 0
    %915 = vmatprep.subr.bf16.mxu0 0
    %916 = vmatpush2.bf16.msra.mxu0 0
    %917 = vmatprep.subr.bf16.mxu0 0
    %918 = vmatpush2.bf16.msra.mxu0 0
    %919 = vmatprep.subr.bf16.mxu0 0
    %920 = vmatpush2.bf16.msra.mxu0 0
    %921 = vmatprep.subr.bf16.mxu0 0
    %922 = vmatpush2.bf16.msra.mxu0 0
    %923 = vmatprep.subr.bf16.mxu0 0
    %924 = vmatpush2.bf16.msra.mxu0 0
    %925 = vmatprep.subr.bf16.mxu0 0
    %926 = vmatpush2.bf16.msra.mxu0 0
    %927 = vmatprep.subr.bf16.mxu0 0
    %928 = vmatpush2.bf16.msra.mxu0 0
    %929 = vmatprep.mubr.bf16.mxu0 0
    %930 = vmatmul.mubr.bf16.gmra.mxu0 %v796
    %v931 = vpop.f32.mrf.mxu0
    %v932 = vadd.f32 %v705, %v931
    %v933 = vpop.f32.mrf.mxu0
    %v934 = vpop.f32.mrf.mxu0
    %v935 = vpop.f32.mrf.mxu0
    %936 = vdwg.mxu0
    %v937 = vadd.f32 %v851, %v853
    %938 = vadd.xlane.f32.xlu0 %v937
    %v939 = vpop.xlane.xlu0 %938
    %v940 = vadd.f32 %v893, %v932
    %941 = vadd.xlane.f32.xlu0 %v940
    %v942 = vpop.xlane.xlu0 %941
    %vm943 = vcmask 7168
    %v944 = vsel %vm943, %v939, %v942
    %v945 = vmul.f32 %v944, 0.00390625
    %v946 = vld [vmem:[%s3] sm:$0xf]
    %v947 = vpack.c.bf16 %v945, %v945
    %v948 = vld [vmem:[%s4] sm:$0xff]
    %950 = vset.pattern.permute.xlu0 0
    %951 = vperm.xlu0 %950, %v948
    %v952 = vpop.permute.xlu0 %951
    %vm954 = vcmask 64512
    %v956 = vsel %vm954, %v946, 0
    %v959 = vsel %vm621, %v947, 0
    %961 = vmatprep.subr.bf16.mxu0 0
    %962 = vmatpush1.bf16.msra.mxu0 0
    %963 = vmatprep.subr.bf16.mxu0 0
    %964 = vmatpush1.bf16.msra.mxu0 0
    %965 = vmatprep.subr.bf16.mxu0 0
    %966 = vmatpush1.bf16.msra.mxu0 0
    %967 = vmatprep.subr.bf16.mxu0 0
    %968 = vmatpush1.bf16.msra.mxu0 0
    %969 = vmatprep.subr.bf16.mxu0 0
    %970 = vmatpush1.bf16.msra.mxu0 0
    %971 = vmatprep.subr.bf16.mxu0 0
    %972 = vmatpush1.bf16.msra.mxu0 0
    %973 = vmatprep.subr.bf16.mxu0 0
    %974 = vmatpush1.bf16.msra.mxu0 0
    %975 = vmatprep.subr.bf16.mxu0 0
    %976 = vmatpush1.bf16.msra.mxu0 %v959
    %977 = vmatprep.subr.bf16.mxu0 0
    %978 = vmatpush2.bf16.msra.mxu0 0
    %979 = vmatprep.subr.bf16.mxu0 0
    %980 = vmatpush2.bf16.msra.mxu0 0
    %981 = vmatprep.subr.bf16.mxu0 0
    %982 = vmatpush2.bf16.msra.mxu0 0
    %983 = vmatprep.subr.bf16.mxu0 0
    %984 = vmatpush2.bf16.msra.mxu0 0
    %985 = vmatprep.subr.bf16.mxu0 0
    %986 = vmatpush2.bf16.msra.mxu0 0
    %987 = vmatprep.subr.bf16.mxu0 0
    %988 = vmatpush2.bf16.msra.mxu0 0
    %989 = vmatprep.subr.bf16.mxu0 0
    %990 = vmatpush2.bf16.msra.mxu0 0
    %991 = vmatprep.subr.bf16.mxu0 0
    %992 = vmatpush2.bf16.msra.mxu0 0
    %993 = vmatprep.mubr.bf16.mxu0 0
    %994 = vmatmul.mubr.bf16.gmra.mxu0 %v956
    %v995 = vpop.f32.mrf.mxu0
    %v996 = vadd.f32 %v952, %v995
    %v997 = vpop.f32.mrf.mxu0
    %v998 = vpop.f32.mrf.mxu0
    %v999 = vpop.f32.mrf.mxu0
    %1000 = vdwg.mxu0
    %v1001 = vxor.u32 %v996, 2147483648
    %v1002 = vmul.f32 %v1001, 1.442695
    %v1003 = vpow.pop %v1002
    %v1004 = vadd.f32 %v1003, 1.0
    %v1005 = vrcp.pop %v1004
    %v1006 = vmul.f32 1.0, %v1005
    %1008 = vset.pattern.permute.xlu0 0
    %1009 = vperm.xlu0 %1008, %v1006
    %v1010 = vpop.permute.xlu0 %1009
    %v1012 = vmul.f32 %v851, %v1010
    %v1013 = vmul.f32 %v853, %v1010
    %v1014 = vpack.c.bf16 %v1012, %v1012
    %v1015 = vpack.c.bf16 %v1013, %v1013
    %v1018 = vunpack.c.l.b16 %v1014
    %v1019 = vunpack.c.l.b16 %v1015
    %v1020 = vpack.c.b16 %v1019, %v1018
    %1022 = vst [vmem:[#allocation2] sm:$0xff] %v1020
    %1023 = vset.pattern.permute.xlu0 1
    %1024 = vperm.xlu0 %1023, %v1006
    %v1025 = vpop.permute.xlu0 %1024
    %v1027 = vmul.f32 %v893, %v1025
    %v1028 = vmul.f32 %v932, %v1025
    %v1029 = vpack.c.bf16 %v1027, %v1027
    %v1030 = vpack.c.bf16 %v1028, %v1028
    %v1033 = vunpack.c.l.b16 %v1029
    %v1034 = vunpack.c.l.b16 %v1030
    %v1035 = vpack.c.b16 %v1034, %v1033
    %s1037 = scalar_lea.vmem [#allocation2], 8
    %1038 = vst [vmem:[%s1037] sm:$0xff] %v1035
    // Predicated region
    $region22: #{tpu_custom_call.1} parent=1 // pred_check
      _
    $region23: #{tpu_custom_call.1} parent=1 // pred_check_branch
      %1040 = sbr.rel (0) target = $region25
    $region24: #{tpu_custom_call.1} parent=1 // pred_region
      %s1042 = ssub.s32 256, 256
      %1043 = vsyncadd [#allocation3], %s1042
      %s1044 = sshll.u32 [#allocation2], 4
      %s1045 = int_to_ptr.vmem [resolvable:$true] %s1044
      %1050 = dma.vmem_to_hbm [thread:$0]  %s1045, 256, %s5, [#allocation3], 128, 128, 8
    $region25: #{tpu_custom_call.1} parent=1 // pred_fallthru
      _
    // Predicated region
    $region26: #{tpu_custom_call.1} parent=1 // pred_check
      _
    $region27: #{tpu_custom_call.1} parent=1 // pred_check_branch
      %1052 = sbr.rel (0) target = $region29
    $region28: #{tpu_custom_call.1} parent=1 // pred_region
      %1053 = dma.done [#allocation3], 256
    $region29: #{tpu_custom_call.1} parent=1 // pred_fallthru
      _
    %1054 = vsyncpa [#allocation3], 1

</llo_original>
